<compile_context>
chip_gen: v5e
topology: v5e:2x2
jax: 0.10.0
libtpu: 0.0.40
codegen_flags: <defaults>
</compile_context>

<pallas_src>
import functools

import jax
import jax.numpy as jnp
from jax import lax
from jax.experimental import pallas as pl
from jax.experimental.pallas import tpu as pltpu


def _layernormal_kernel(x_ref, w_ref, b_ref, o_ref, *, eps: float, n: float):
    x = x_ref[...].astype(jnp.float32)

    # Two-pass moments (numerically robust; per-row, so overhang rows in the
    # last block stay isolated and their masked-out writes never matter).
    mu = jnp.mean(x, axis=-1, keepdims=True)
    xc = x - mu
    # Unbiased variance (Bessel's correction), matching torch.std.
    var = jnp.sum(xc * xc, axis=-1, keepdims=True) * (1.0 / (n - 1.0))

    # sigma = max(sqrt(var), eps)  ->  1/sigma = min(rsqrt(var), 1/eps)
    inv_sigma = jnp.minimum(lax.rsqrt(var), 1.0 / eps)

    out = xc * inv_sigma * w_ref[...] + b_ref[...]
    o_ref[...] = out.astype(o_ref.dtype)


def _round_up(x: int, m: int) -> int:
    return ((x + m - 1) // m) * m


def layer_normal(x, weight, bias, eps: float = 1e-6,
                 row_block: int | None = None,
                 vmem_cap_bytes: int = 48 << 20):
    """Pallas equivalent of LayerNormal.forward.

    x:      (..., hidden)
    weight: (hidden,)
    bias:   (hidden,)
    """
    orig_shape = x.shape
    hidden = int(orig_shape[-1])
    rows = 1
    for d in orig_shape[:-1]:
        rows *= int(d)
    rows = max(rows, 1)
    out_dtype = x.dtype
    itemsize = jnp.dtype(x.dtype).itemsize

    # Sublane packing factor for the row (second-minor) axis.
    packing = {4: 8, 2: 16, 1: 32}.get(itemsize, 8)

    # Pick row_block: ~4 MiB input tiles (HBM-roofline territory, and small
    # enough that double-buffered in/out + ~3x f32 temporaries fit v7x's 64 MiB
    # VMEM). Rounded to the sublane packing; the last grid block may overhang.
    if rows <= packing:
        row_block = rows                      # full-dim exemption for tiny inputs
    else:
        if row_block is None:
            target_tile_bytes = 4 << 20
            bytes_per_row = max(hidden * itemsize, 1)
            row_block = max(packing, target_tile_bytes // bytes_per_row)
        row_block = min(int(row_block), _round_up(rows, packing))
        row_block = max(packing, (int(row_block) // packing) * packing)

    grid = (pl.cdiv(rows, row_block),)

    # No padding of x: kernel blocks are (row_block, hidden) with the lane dim
    # equal to the full array dim. Weight/bias are tiny; just cast to f32.
    x2 = x.reshape(rows, hidden)
    w2 = weight.astype(jnp.float32).reshape(1, hidden)
    b2 = bias.astype(jnp.float32).reshape(1, hidden)

    # Scoped-VMEM budget: double-buffered in+out tiles, pinned weight/bias, and
    # ~3 f32-tile worth of kernel-local temporaries (upcast x, centered x, out).
    hid_vmem = _round_up(hidden, 128)
    rb_vmem = _round_up(row_block, packing)
    in_bytes = rb_vmem * hid_vmem * itemsize
    out_bytes = rb_vmem * hid_vmem * jnp.dtype(out_dtype).itemsize
    tmp_bytes = 3 * rb_vmem * hid_vmem * 4
    wb_bytes = 2 * hid_vmem * 4
    needed = 2 * (in_bytes + out_bytes) + tmp_bytes + 2 * wb_bytes
    vmem_limit = int(min(max(needed + (4 << 20), 32 << 20), vmem_cap_bytes))

    out2 = pl.pallas_call(
        functools.partial(_layernormal_kernel, eps=float(eps), n=float(hidden)),
        out_shape=jax.ShapeDtypeStruct((rows, hidden), out_dtype),
        grid=grid,
        in_specs=[
            pl.BlockSpec((row_block, hidden), lambda i: (i, 0)),
            pl.BlockSpec((1, hidden), lambda i: (0, 0)),
            pl.BlockSpec((1, hidden), lambda i: (0, 0)),
        ],
        out_specs=pl.BlockSpec((row_block, hidden), lambda i: (i, 0)),
        compiler_params=pltpu.CompilerParams(
            dimension_semantics=("parallel",),   # lets v7x shard rows across 2 TCs
            vmem_limit_bytes=vmem_limit,
        ),
    )(x2, w2, b2)

    return out2.reshape(orig_shape)


def _reference(x, weight, bias, eps=1e-6):
    # Pure-JAX reference mirroring the PyTorch forward exactly (two-pass).
    mu = jnp.mean(x, axis=-1, keepdims=True)
    n = x.shape[-1]
    var = jnp.sum((x - mu) ** 2, axis=-1, keepdims=True) / (n - 1)
    sigma = jnp.maximum(jnp.sqrt(var), eps)
    return (x - mu) / sigma * weight + bias


if __name__ == "__main__":
    key = jax.random.PRNGKey(0)
    k1, k2 = jax.random.split(key)

    # Case 1: module-default params (ones / zeros), small shape.
    batch, seq, hidden = 2, 8, 32
    x = jax.random.normal(k1, (batch, seq, hidden), dtype=jnp.float32)
    weight = jnp.ones((hidden,), dtype=jnp.float32)
    bias = jnp.zeros((hidden,), dtype=jnp.float32)

    out = jax.block_until_ready(layer_normal(x, weight, bias, eps=1e-6))
    ref = _reference(x, weight, bias, eps=1e-6)
    assert out.shape == x.shape
    assert jnp.allclose(out, ref, atol=1e-4, rtol=1e-4), "case1 mismatch vs reference"

    # Case 2: exercises the overhanging last row block (3*37 = 111 rows) and an
    # unaligned hidden (200, not a multiple of 128) with non-trivial affine
    # params — no HBM-side padding or output slicing anywhere.
    b2_, s2_, h2_ = 3, 37, 200
    x2 = jax.random.normal(k2, (b2_, s2_, h2_), dtype=jnp.float32) * 2.0 + 0.5
    w2 = jnp.linspace(0.5, 1.5, h2_, dtype=jnp.float32)
    bb2 = jnp.linspace(-0.2, 0.2, h2_, dtype=jnp.float32)

    out2 = jax.block_until_ready(layer_normal(x2, w2, bb2, eps=1e-6))
    ref2 = _reference(x2, w2, bb2, eps=1e-6)
    assert out2.shape == x2.shape
    assert jnp.allclose(out2, ref2, atol=1e-4, rtol=1e-4), "case2 mismatch vs reference"

    print("KERNEL_OK")
</pallas_src>

<mosaic_0001>
module attributes {stable_mosaic.version = 11 : i64} {
  func.func @_layernormal_kernel(%arg0: i32, %arg1: memref<16x32xf32, #tpu.memory_space<vmem>>, %arg2: memref<1x32xf32, #tpu.memory_space<vmem>>, %arg3: memref<1x32xf32, #tpu.memory_space<vmem>>, %arg4: memref<16x32xf32, #tpu.memory_space<vmem>>) attributes {dimension_semantics = [#tpu.dimension_semantics<parallel>], iteration_bounds = array<i64: 1>, scalar_prefetch = 0 : i64, scratch_operands = 0 : i64, tpu.core_type = #tpu.core_type<tc>, window_params = [{transform_indices = @transform_0, window_bounds = array<i64: 16, 32>}, {pipeline_mode = #tpu.pipeline_mode<synchronous>, transform_indices = @transform_1, window_bounds = array<i64: 1, 32>}, {pipeline_mode = #tpu.pipeline_mode<synchronous>, transform_indices = @transform_2, window_bounds = array<i64: 1, 32>}, {transform_indices = @transform_3, window_bounds = array<i64: 16, 32>}]} {
    %c0 = arith.constant 0 : index
    %c0_0 = arith.constant 0 : index
    %0 = vector.load %arg1[%c0, %c0_0] : memref<16x32xf32, #tpu.memory_space<vmem>>, vector<16x32xf32>
    %cst = arith.constant dense<0.000000e+00> : vector<16xf32>
    %1 = vector.multi_reduction <add>, %0, %cst [1] : vector<16x32xf32> to vector<16xf32>
    %2 = vector.shape_cast %1 : vector<16xf32> to vector<16x1xf32>
    %cst_1 = arith.constant 3.200000e+01 : f32
    %3 = vector.broadcast %cst_1 : f32 to vector<16x1xf32>
    %4 = arith.divf %2, %3 : vector<16x1xf32>
    %5 = vector.broadcast %4 : vector<16x1xf32> to vector<16x32xf32>
    %6 = arith.subf %0, %5 : vector<16x32xf32>
    %7 = arith.mulf %6, %6 : vector<16x32xf32>
    %cst_2 = arith.constant dense<0.000000e+00> : vector<16xf32>
    %8 = vector.multi_reduction <add>, %7, %cst_2 [1] : vector<16x32xf32> to vector<16xf32>
    %9 = vector.shape_cast %8 : vector<16xf32> to vector<16x1xf32>
    %cst_3 = arith.constant 0.0322580636 : f32
    %10 = vector.broadcast %cst_3 : f32 to vector<16x1xf32>
    %11 = arith.mulf %9, %10 : vector<16x1xf32>
    %12 = math.rsqrt %11 : vector<16x1xf32>
    %cst_4 = arith.constant 1.000000e+06 : f32
    %13 = vector.broadcast %cst_4 : f32 to vector<16x1xf32>
    %14 = arith.minimumf %12, %13 : vector<16x1xf32>
    %15 = vector.broadcast %14 : vector<16x1xf32> to vector<16x32xf32>
    %16 = arith.mulf %6, %15 : vector<16x32xf32>
    %c0_5 = arith.constant 0 : index
    %c0_6 = arith.constant 0 : index
    %17 = vector.load %arg2[%c0_5, %c0_6] : memref<1x32xf32, #tpu.memory_space<vmem>>, vector<1x32xf32>
    %18 = vector.broadcast %17 : vector<1x32xf32> to vector<16x32xf32>
    %19 = arith.mulf %16, %18 : vector<16x32xf32>
    %c0_7 = arith.constant 0 : index
    %c0_8 = arith.constant 0 : index
    %20 = vector.load %arg3[%c0_7, %c0_8] : memref<1x32xf32, #tpu.memory_space<vmem>>, vector<1x32xf32>
    %21 = vector.broadcast %20 : vector<1x32xf32> to vector<16x32xf32>
    %22 = arith.addf %19, %21 : vector<16x32xf32>
    %c0_9 = arith.constant 0 : index
    %c0_10 = arith.constant 0 : index
    %23 = vector.load %arg4[%c0_9, %c0_10] : memref<16x32xf32, #tpu.memory_space<vmem>>, vector<16x32xf32>
    tpu.vector_store %arg4[%c0_9, %c0_10], %22 {strides = array<i32>} : memref<16x32xf32, #tpu.memory_space<vmem>>, vector<16x32xf32>,
    return
  }
  func.func @transform_0(%arg0: i32) -> (i32, i32) {
    %c0_i32 = arith.constant 0 : i32
    %c0_i32_0 = arith.constant 0 : i32
    return %arg0, %c0_i32 : i32, i32
  }
  func.func @transform_1(%arg0: i32) -> (i32, i32) {
    %c0_i32 = arith.constant 0 : i32
    %c0_i32_0 = arith.constant 0 : i32
    %c0_i32_1 = arith.constant 0 : i32
    return %c0_i32, %c0_i32_0 : i32, i32
  }
  func.func @transform_2(%arg0: i32) -> (i32, i32) {
    %c0_i32 = arith.constant 0 : i32
    %c0_i32_0 = arith.constant 0 : i32
    %c0_i32_1 = arith.constant 0 : i32
    return %c0_i32, %c0_i32_0 : i32, i32
  }
  func.func @transform_3(%arg0: i32) -> (i32, i32) {
    %c0_i32 = arith.constant 0 : i32
    %c0_i32_0 = arith.constant 0 : i32
    return %arg0, %c0_i32 : i32, i32
  }
}

</mosaic_0001>

<llo_original>
// kernel: tpu_custom_call.1
$region0: #{tpu_custom_call.1}
  #allocation0 [shape = 'u32[]', space=smem, size = 0x4, offset = 0x4, fixed_abs, tag = 'smem constant byte address 0x4 - core index']
  #allocation1 [shape = 'u32[72,128]{1,0:T(1,128)}', space=vmem, size = 0x9000, scoped, tag = 'internal scratch']
  %s0 = inlined_call_operand.hbm [shape: f32[16,32], index: 0, kind: input, shape index: {}]
  %s1 = inlined_call_operand.hbm [shape: f32[1,32], index: 1, kind: input, shape index: {}]
  %s2 = inlined_call_operand.vmem [shape: f32[1,32], index: 2, kind: input, shape index: {}]
  %s3 = inlined_call_operand.hbm [shape: f32[16,32], index: 3, kind: output, shape index: {}]
  %s4 = sld [smem:[#allocation0]]
  $region30: #{tpu_custom_call.1} parent=0
    _
  %s6 = ssub.s32 1, %s4
  %s7 = scalar_select 0, %s6, %s4
  $region1: #{tpu_custom_call.1} parent=0
    #allocation2 [shape = 'u8[8192]{0}', space=vmem, size = 0x2000, scoped, tag = 'input window, operand 0, single buffered']
    #allocation3 [shape = 's32[1]{0}', space=sflag, size = 0x4, scoped, tag = 'scoped memory for tpu_custom_call.1']
    #allocation4 [shape = 's32[1]{0}', space=sflag, size = 0x4, scoped, tag = 'scoped memory for tpu_custom_call.1']
    #allocation5 [shape = 'u8[512]{0}', space=vmem, size = 0x400, scoped, tag = 'input window, operand 1, single buffered']
    #allocation6 [shape = 's32[1]{0}', space=sflag, size = 0x4, scoped, tag = 'scoped memory for tpu_custom_call.1']
    #allocation7 [shape = 'u8[8192]{0}', space=vmem, size = 0x2000, scoped, tag = 'output window, operand 0, single buffered']
    %8 = vsyncpa [#allocation3], 0
    %9 = vsyncpa [#allocation6], 0
    %10 = vsyncpa [#allocation4], 0
    // Predicated region
    $region2: #{tpu_custom_call.1} parent=1 // pred_check
      _
    $region3: #{tpu_custom_call.1} parent=1 // pred_check_branch
      %12 = sbr.rel (0) target = $region5
    $region4: #{tpu_custom_call.1} parent=1 // pred_region
      %14 = vsyncadd [#allocation3], 0
      %s15 = sshll.u32 %s0, 4
      %s16 = int_to_ptr.hbm [resolvable:$true] %s15
      %s17 = sshll.u32 [#allocation2], 4
      %s18 = int_to_ptr.vmem [resolvable:$true] %s17
      %23 = dma.hbm_to_vmem [thread:$0]  %s16, 256, %s18, [#allocation3], 128, 128, 8
    $region5: #{tpu_custom_call.1} parent=1 // pred_fallthru
      _
    // Predicated region
    $region6: #{tpu_custom_call.1} parent=1 // pred_check
      _
    $region7: #{tpu_custom_call.1} parent=1 // pred_check_branch
      %25 = sbr.rel (0) target = $region9
    $region8: #{tpu_custom_call.1} parent=1 // pred_region
      %27 = vsyncadd [#allocation6], 0
      %s29 = sshll.u32 %s1, 4
      %s30 = int_to_ptr.hbm [resolvable:$true] %s29
      %s31 = sshll.u32 [#allocation5], 4
      %s32 = int_to_ptr.vmem [resolvable:$true] %s31
      %34 = dma.hbm_to_vmem [thread:$0]  %s30, 16, %s32, [#allocation6]
    $region9: #{tpu_custom_call.1} parent=1 // pred_fallthru
      _
    // Predicated region
    $region10: #{tpu_custom_call.1} parent=1 // pred_check
      _
    $region11: #{tpu_custom_call.1} parent=1 // pred_check_branch
      %36 = sbr.rel (0) target = $region13
    $region12: #{tpu_custom_call.1} parent=1 // pred_region
      _
    $region13: #{tpu_custom_call.1} parent=1 // pred_fallthru
      _
    // Predicated region
    $region14: #{tpu_custom_call.1} parent=1 // pred_check
      _
    $region15: #{tpu_custom_call.1} parent=1 // pred_check_branch
      %38 = sbr.rel (0) target = $region17
    $region16: #{tpu_custom_call.1} parent=1 // pred_region
      %40 = dma.done [#allocation3], 256
    $region17: #{tpu_custom_call.1} parent=1 // pred_fallthru
      _
    // Predicated region
    $region18: #{tpu_custom_call.1} parent=1 // pred_check
      _
    $region19: #{tpu_custom_call.1} parent=1 // pred_check_branch
      %42 = sbr.rel (0) target = $region21
    $region20: #{tpu_custom_call.1} parent=1 // pred_region
      %44 = dma.done [#allocation6], 16
    $region21: #{tpu_custom_call.1} parent=1 // pred_fallthru
      _
    %v45 = vld [vmem:[#allocation2] sm:$0xff]
    %v46 = vld [vmem:[#allocation2 + $0x8] sm:$0xff]
    %vm47 = vcmask 261120
    %v48 = vsel %vm47, %v45, 0.0
    %49 = vadd.xlane.f32.xlu0 %v48
    %v50 = vpop.xlane.xlu0 %49
    %v51 = vsel %vm47, %v46, 0.0
    %52 = vadd.xlane.f32.xlu0 %v51
    %v53 = vpop.xlane.xlu0 %52
    %v54 = vrcp.pop 32.0
    %v55 = vmul.f32 32.0, %v54
    %v56 = vsub.f32 1.0, %v55
    %v57 = vmul.f32 %v54, %v56
    %v58 = vadd.f32 %v54, %v57
    %vm59 = vweird.f32 %v54
    %v60 = vsel %vm59, %v54, %v58
    %v61 = vmul.f32 %v50, %v60
    %v62 = vmul.f32 %v53, %v60
    %v63 = vsub.f32 %v45, %v61
    %v64 = vsub.f32 %v46, %v62
    %v65 = vmul.f32 %v63, %v63
    %v66 = vmul.f32 %v64, %v64
    %v67 = vsel %vm47, %v65, 0.0
    %68 = vadd.xlane.f32.xlu0 %v67
    %v69 = vpop.xlane.xlu0 %68
    %v70 = vsel %vm47, %v66, 0.0
    %71 = vadd.xlane.f32.xlu0 %v70
    %v72 = vpop.xlane.xlu0 %71
    %v73 = vmul.f32 %v69, 0.032258064
    %v74 = vmul.f32 %v72, 0.032258064
    %v75 = vrsqrt.pop %v73
    %v76 = vmul.f32 %v75, %v73
    %v77 = vmul.f32 %v76, %v75
    %v78 = vmul.f32 0.5, %v77
    %v79 = vsub.f32 1.5, %v78
    %v80 = vmul.f32 %v75, %v79
    %vm81 = vweird.f32 %v73
    %vm82 = vweird.f32 %v75
    %vm83 = vmor %vm81, %vm82
    %v84 = vsel %vm83, %v75, %v80
    %v85 = vrsqrt.pop %v74
    %v86 = vmul.f32 %v85, %v74
    %v87 = vmul.f32 %v86, %v85
    %v88 = vmul.f32 0.5, %v87
    %v89 = vsub.f32 1.5, %v88
    %v90 = vmul.f32 %v85, %v89
    %vm91 = vweird.f32 %v74
    %vm92 = vweird.f32 %v85
    %vm93 = vmor %vm91, %vm92
    %v94 = vsel %vm93, %v85, %v90
    %v95 = vmin.f32 %v84, 1000000.0
    %v96 = vmin.f32 %v94, 1000000.0
    %v97 = vmul.f32 %v63, %v95
    %v98 = vmul.f32 %v64, %v96
    %v99 = vld [vmem:[#allocation5] sm:$0x1]
    %v101 = vperm.slane %v99, 0
    %v103 = vmul.f32 %v97, %v101
    %v104 = vmul.f32 %v98, %v101
    %v105 = vld [vmem:[%s2] sm:$0x1]
    %v107 = vperm.slane %v105, 0
    %v109 = vadd.f32 %v103, %v107
    %v110 = vadd.f32 %v104, %v107
    %111 = vst.msk [vmem:[#allocation7] sm:$0xff] %vm47, %v109
    %112 = vst.msk [vmem:[#allocation7 + $0x8] sm:$0xff] %vm47, %v110
    // Predicated region
    $region22: #{tpu_custom_call.1} parent=1 // pred_check
      _
    $region23: #{tpu_custom_call.1} parent=1 // pred_check_branch
      %114 = sbr.rel (0) target = $region25
    $region24: #{tpu_custom_call.1} parent=1 // pred_region
      %116 = vsyncadd [#allocation4], 0
      %s117 = sshll.u32 [#allocation7], 4
      %s118 = int_to_ptr.vmem [resolvable:$true] %s117
      %s119 = sshll.u32 %s3, 4
      %s120 = int_to_ptr.hbm [resolvable:$true] %s119
      %125 = dma.vmem_to_hbm [thread:$0]  %s118, 256, %s120, [#allocation4], 128, 128, 8
    $region25: #{tpu_custom_call.1} parent=1 // pred_fallthru
      _
    // Predicated region
    $region26: #{tpu_custom_call.1} parent=1 // pred_check
      _
    $region27: #{tpu_custom_call.1} parent=1 // pred_check_branch
      %127 = sbr.rel (0) target = $region29
    $region28: #{tpu_custom_call.1} parent=1 // pred_region
      %129 = dma.done [#allocation4], 256
    $region29: #{tpu_custom_call.1} parent=1 // pred_fallthru
      _
    %130 = vsyncpa [#allocation3], 1
    %131 = vsyncpa [#allocation6], 1
    %132 = vsyncpa [#allocation4], 1

</llo_original>
